<compile_context>
chip_gen: v7x
topology: tpu7x:2x2x1
jax: 0.10.0
libtpu: 0.0.40
codegen_flags: <defaults>
</compile_context>

<pallas_src>
import functools

import jax
import jax.numpy as jnp
from jax.experimental import pallas as pl
from jax.experimental.pallas import tpu as pltpu

_EPS = 1e-5


def _ce_stable_kernel(logits_ref, labels_ref, out_ref, *, n_rows, eps):
    # logits_ref: (TN, C) native dtype; labels_ref: (TN, 1) int32
    # out_ref: (1, 8, 128) f32 -- per-tile partial sum, broadcast over block
    tn, c = logits_ref.shape
    x = logits_ref[...]                                          # (TN, C) native
    lbl = labels_ref[...]                                         # (TN, 1) int32

    # one-hot mask via a (1, C) iota broadcast against (TN, 1) labels
    cls_idx = jax.lax.broadcasted_iota(jnp.int32, (1, c), 1)      # (1, C)
    onehot = cls_idx == lbl                                       # (TN, C) bool

    # stable-softmax pieces; cast to f32 only at the exp input
    m = jnp.max(x, axis=-1, keepdims=True)                        # (TN, 1) native
    e = jnp.exp((x - m).astype(jnp.float32))                      # (TN, C) f32
    denom = jnp.sum(e, axis=-1, keepdims=True)                    # (TN, 1) f32

    # gather the target logit pre-exp (one nonzero per row -> exact sum)
    x_t = jnp.sum(jnp.where(onehot, x, jnp.zeros_like(x)),
                  axis=-1, keepdims=True)                         # (TN, 1) native
    e_t = jnp.exp((x_t - m).astype(jnp.float32))                  # (TN, 1) f32

    # log(softmax(x)[t] + eps) = log(e_t + eps*denom) - log(denom)
    logp_t = jnp.log(e_t + eps * denom) - jnp.log(denom)          # (TN, 1) f32

    # mask padded rows (static n_rows baked in) and reduce inside the kernel
    i = pl.program_id(0)
    row_idx = i * tn + jax.lax.broadcasted_iota(jnp.int32, (tn, 1), 0)
    valid = row_idx < n_rows
    nll = jnp.where(valid, -logp_t, 0.0)                          # (TN, 1) f32
    partial = jnp.sum(nll, axis=0, keepdims=True)                 # (1, 1) f32

    out_ref[...] = jnp.broadcast_to(jnp.reshape(partial, (1, 1, 1)), (1, 8, 128))


def _round_up(x, m):
    return ((x + m - 1) // m) * m


def cross_entropy_loss_stable(outputs, labels, *, block_rows=None, eps=_EPS):
    """outputs: (N, C) float; labels: (N,) int. Returns scalar f32 loss matching
    torch: NLLLoss(log(Softmax(outputs) + eps), labels), reduction='mean'."""
    n, c = outputs.shape
    itemsize = jnp.dtype(outputs.dtype).itemsize

    # ---- generation-aware VMEM budgets ----
    try:
        vmem_cap = pltpu.get_tpu_info().vmem_capacity_bytes
    except Exception:
        vmem_cap = 64 * 1024 * 1024                    # conservative (v7x-sized)
    if vmem_cap >= 128 * 1024 * 1024:                  # v5e / v6e
        vmem_limit = 64 * 1024 * 1024
        tile_budget = 12 * 1024 * 1024
    else:                                              # v7x (64 MiB per TC)
        vmem_limit = 48 * 1024 * 1024
        tile_budget = 4 * 1024 * 1024

    # ---- row tile: budget includes double-buffered input + f32 temporaries ----
    if block_rows is None:
        cap = 1024 if itemsize <= 2 else 512
        bytes_per_row = c * (2 * itemsize + 8) + 64
        tn = min(cap, max(8, tile_budget // bytes_per_row))
        if n > 8:
            # ensure >= 2 grid tiles so both v7x TensorCores get work
            tn = min(tn, _round_up((n + 1) // 2, 8))
    else:
        tn = block_rows
    tn = max(8, (tn // 8) * 8)
    tn = min(tn, _round_up(n, 8))

    # ---- pad rows to a tile multiple (padded rows masked inside the kernel) ----
    n_pad = _round_up(n, tn)
    if n_pad != n:
        outputs = jnp.pad(outputs, ((0, n_pad - n), (0, 0)))
        labels = jnp.pad(labels, ((0, n_pad - n),))
    labels2d = labels.astype(jnp.int32).reshape(n_pad, 1)
    num_tiles = n_pad // tn

    cost = pl.CostEstimate(
        flops=5 * n_pad * c + 16 * n_pad,
        transcendentals=n_pad * (c + 1) + 2 * n_pad,
        bytes_accessed=n_pad * c * itemsize + n_pad * 4 + num_tiles * 8 * 128 * 4,
    )

    partials = pl.pallas_call(
        functools.partial(_ce_stable_kernel, n_rows=n, eps=eps),
        out_shape=jax.ShapeDtypeStruct((num_tiles, 8, 128), jnp.float32),
        grid_spec=pl.GridSpec(
            grid=(num_tiles,),
            in_specs=[
                pl.BlockSpec((tn, c), lambda i: (i, 0)),   # logits row-tile
                pl.BlockSpec((tn, 1), lambda i: (i, 0)),   # labels row-tile
            ],
            out_specs=pl.BlockSpec((1, 8, 128), lambda i: (i, 0, 0)),
        ),
        compiler_params=pltpu.CompilerParams(
            dimension_semantics=("parallel",),
            vmem_limit_bytes=vmem_limit,
        ),
        cost_estimate=cost,
    )(outputs, labels2d)

    # mean over the real (unpadded) rows: sum of num_tiles partial sums / n
    return jnp.sum(partials[:, 0, 0]) / n


def _reference(outputs, labels):
    # pure-JAX reference mirroring the PyTorch module
    p = jax.nn.softmax(outputs.astype(jnp.float32), axis=-1)
    logp = jnp.log(p + _EPS)
    picked = jnp.take_along_axis(logp, labels.astype(jnp.int32)[:, None], axis=-1)
    return -jnp.mean(picked)


if __name__ == "__main__":
    key = jax.random.PRNGKey(0)
    k1, k2, k3, k4, k5, k6 = jax.random.split(key, 6)

    # Case 1: small single-tile f32 (batch=8, 32 classes).
    N, C = 8, 32
    logits = jax.random.normal(k1, (N, C), dtype=jnp.float32) * 3.0
    labels = jax.random.randint(k2, (N,), 0, C, dtype=jnp.int32)
    loss = cross_entropy_loss_stable(logits, labels)
    jax.block_until_ready(loss)
    ref = _reference(logits, labels)
    assert jnp.allclose(loss, ref, atol=1e-5, rtol=1e-5), (loss, ref)

    # Case 2: ragged N + multi-tile (padding and in-kernel row masking path).
    N2, C2 = 40, 32
    logits2 = jax.random.normal(k3, (N2, C2), dtype=jnp.float32) * 2.0
    labels2 = jax.random.randint(k4, (N2,), 0, C2, dtype=jnp.int32)
    loss2 = cross_entropy_loss_stable(logits2, labels2, block_rows=16)
    jax.block_until_ready(loss2)
    ref2 = _reference(logits2, labels2)
    assert jnp.allclose(loss2, ref2, atol=1e-5, rtol=1e-5), (loss2, ref2)

    # Case 3: bf16 inputs -> native-dtype elementwise path (looser tolerance).
    N3, C3 = 32, 64
    logits3 = (jax.random.normal(k5, (N3, C3), dtype=jnp.float32) * 2.0).astype(jnp.bfloat16)
    labels3 = jax.random.randint(k6, (N3,), 0, C3, dtype=jnp.int32)
    loss3 = cross_entropy_loss_stable(logits3, labels3, block_rows=16)
    jax.block_until_ready(loss3)
    ref3 = _reference(logits3, labels3)
    assert jnp.allclose(loss3, ref3, atol=5e-2, rtol=5e-2), (loss3, ref3)

    print("KERNEL_OK")
</pallas_src>

<mosaic_0001>
module attributes {stable_mosaic.version = 11 : i64} {
  func.func @_ce_stable_kernel(%arg0: i32, %arg1: memref<8x32xf32, #tpu.memory_space<vmem>>, %arg2: memref<8x1xi32, #tpu.memory_space<vmem>>, %arg3: memref<1x8x128xf32, #tpu.memory_space<vmem>>) attributes {dimension_semantics = [#tpu.dimension_semantics<parallel>], iteration_bounds = array<i64: 1>, scalar_prefetch = 0 : i64, scratch_operands = 0 : i64, tpu.core_type = #tpu.core_type<tc>, window_params = [{transform_indices = @transform_0, window_bounds = array<i64: 8, 32>}, {transform_indices = @transform_1, window_bounds = array<i64: 8, 1>}, {transform_indices = @transform_2, window_bounds = array<i64: 1, 8, 128>}]} {
    %c0 = arith.constant 0 : index
    %c0_0 = arith.constant 0 : index
    %0 = vector.load %arg1[%c0, %c0_0] : memref<8x32xf32, #tpu.memory_space<vmem>>, vector<8x32xf32>
    %c0_1 = arith.constant 0 : index
    %c0_2 = arith.constant 0 : index
    %1 = vector.load %arg2[%c0_1, %c0_2] : memref<8x1xi32, #tpu.memory_space<vmem>>, vector<8x1xi32>
    %2 = tpu.iota {dimensions = array<i32: 1>} : vector<1x32xi32>
    %3 = vector.broadcast %2 : vector<1x32xi32> to vector<8x32xi32>
    %4 = vector.broadcast %1 : vector<8x1xi32> to vector<8x32xi32>
    %5 = arith.cmpi eq, %3, %4 : vector<8x32xi32>
    %cst = arith.constant dense<0xFF800000> : vector<8xf32>
    %6 = vector.multi_reduction <maximumf>, %0, %cst [1] : vector<8x32xf32> to vector<8xf32>
    %7 = vector.shape_cast %6 : vector<8xf32> to vector<8x1xf32>
    %8 = vector.broadcast %7 : vector<8x1xf32> to vector<8x32xf32>
    %9 = arith.subf %0, %8 : vector<8x32xf32>
    %10 = math.exp %9 : vector<8x32xf32>
    %cst_3 = arith.constant dense<0.000000e+00> : vector<8xf32>
    %11 = vector.multi_reduction <add>, %10, %cst_3 [1] : vector<8x32xf32> to vector<8xf32>
    %12 = vector.shape_cast %11 : vector<8xf32> to vector<8x1xf32>
    %cst_4 = arith.constant 0.000000e+00 : f32
    %13 = vector.broadcast %cst_4 : f32 to vector<8x32xf32>
    %14 = arith.select %5, %0, %13 : vector<8x32xi1>, vector<8x32xf32>
    %cst_5 = arith.constant dense<0.000000e+00> : vector<8xf32>
    %15 = vector.multi_reduction <add>, %14, %cst_5 [1] : vector<8x32xf32> to vector<8xf32>
    %16 = vector.shape_cast %15 : vector<8xf32> to vector<8x1xf32>
    %17 = arith.subf %16, %7 : vector<8x1xf32>
    %18 = math.exp %17 : vector<8x1xf32>
    %cst_6 = arith.constant 9.99999974E-6 : f32
    %19 = vector.broadcast %cst_6 : f32 to vector<8x1xf32>
    %20 = arith.mulf %19, %12 : vector<8x1xf32>
    %21 = arith.addf %18, %20 : vector<8x1xf32>
    %22 = math.log %21 : vector<8x1xf32>
    %23 = math.log %12 : vector<8x1xf32>
    %24 = arith.subf %22, %23 : vector<8x1xf32>
    %c8_i32 = arith.constant 8 : i32
    %25 = arith.muli %arg0, %c8_i32 : i32
    %26 = tpu.iota {dimensions = array<i32: 0>} : vector<8x1xi32>
    %27 = vector.broadcast %25 : i32 to vector<8x1xi32>
    %28 = arith.addi %27, %26 : vector<8x1xi32>
    %c8_i32_7 = arith.constant 8 : i32
    %29 = vector.broadcast %c8_i32_7 : i32 to vector<8x1xi32>
    %30 = arith.cmpi slt, %28, %29 : vector<8x1xi32>
    %cst_8 = arith.constant 0.000000e+00 : f32
    %31 = vector.broadcast %cst_8 : f32 to vector<8x1xf32>
    %32 = arith.subf %31, %24 : vector<8x1xf32>
    %cst_9 = arith.constant 0.000000e+00 : f32
    %33 = vector.broadcast %cst_9 : f32 to vector<8x1xf32>
    %34 = arith.select %30, %32, %33 : vector<8x1xi1>, vector<8x1xf32>
    %cst_10 = arith.constant dense<0.000000e+00> : vector<1xf32>
    %35 = vector.multi_reduction <add>, %34, %cst_10 [0] : vector<8x1xf32> to vector<1xf32>
    %36 = vector.shape_cast %35 : vector<1xf32> to vector<1x1xf32>
    %37 = vector.shape_cast %36 : vector<1x1xf32> to vector<1x1x1xf32>
    %38 = vector.shape_cast %37 : vector<1x1x1xf32> to vector<1x1x1xf32>
    %39 = vector.broadcast %38 : vector<1x1x1xf32> to vector<1x8x128xf32>
    %c0_11 = arith.constant 0 : index
    %c0_12 = arith.constant 0 : index
    %c0_13 = arith.constant 0 : index
    %40 = vector.load %arg3[%c0_11, %c0_12, %c0_13] : memref<1x8x128xf32, #tpu.memory_space<vmem>>, vector<1x8x128xf32>
    tpu.vector_store %arg3[%c0_11, %c0_12, %c0_13], %39 {strides = array<i32>} : memref<1x8x128xf32, #tpu.memory_space<vmem>>, vector<1x8x128xf32>,
    return
  }
  func.func @transform_0(%arg0: i32) -> (i32, i32) {
    %c0_i32 = arith.constant 0 : i32
    %c0_i32_0 = arith.constant 0 : i32
    return %arg0, %c0_i32 : i32, i32
  }
  func.func @transform_1(%arg0: i32) -> (i32, i32) {
    %c0_i32 = arith.constant 0 : i32
    %c0_i32_0 = arith.constant 0 : i32
    return %arg0, %c0_i32 : i32, i32
  }
  func.func @transform_2(%arg0: i32) -> (i32, i32, i32) {
    %c0_i32 = arith.constant 0 : i32
    %c0_i32_0 = arith.constant 0 : i32
    %c0_i32_1 = arith.constant 0 : i32
    return %arg0, %c0_i32, %c0_i32_0 : i32, i32, i32
  }
}

</mosaic_0001>

<llo_original>
// kernel: tpu_custom_call.1
$region0: #{tpu_custom_call.1}
  #allocation0 [shape = 'u32[]', space=smem, size = 0x4, offset = 0x4, fixed_abs, tag = 'smem constant byte address 0x4 - core index']
  #allocation1 [shape = 'u32[144,128]{1,0:T(1,128)}', space=vmem, size = 0x12000, scoped, tag = 'internal scratch']
  %s0 = inlined_call_operand.vmem [shape: f32[8,32], index: 0, kind: input, shape index: {}]
  %s1 = inlined_call_operand.vmem [shape: s32[8,1], index: 1, kind: input, shape index: {}]
  %s2 = inlined_call_operand.hbm [shape: f32[1,8,128], index: 2, kind: output, shape index: {}]
  %s3 = sld [smem:[#allocation0]]
  $region18: #{tpu_custom_call.1} parent=0
    _
  %s5 = ssub.s32 1, %s3
  %s6 = scalar_select 0, %s5, %s3
  $region1: #{tpu_custom_call.1} parent=0
    #allocation2 [shape = 'u8[4096]{0}', space=vmem, size = 0x1000, scoped, tag = 'output window, operand 0, single buffered']
    #allocation3 [shape = 's32[1]{0}', space=sflag, size = 0x4, scoped, tag = 'scoped memory for tpu_custom_call.1']
    %7 = vsyncpa [#allocation3], 0
    // Predicated region
    $region2: #{tpu_custom_call.1} parent=1 // pred_check
      _
    $region3: #{tpu_custom_call.1} parent=1 // pred_check_branch
      %9 = sbr.rel (0) target = $region5
    $region4: #{tpu_custom_call.1} parent=1 // pred_region
      _
    $region5: #{tpu_custom_call.1} parent=1 // pred_fallthru
      _
    // Predicated region
    $region6: #{tpu_custom_call.1} parent=1 // pred_check
      _
    $region7: #{tpu_custom_call.1} parent=1 // pred_check_branch
      %11 = sbr.rel (0) target = $region9
    $region8: #{tpu_custom_call.1} parent=1 // pred_region
      _
    $region9: #{tpu_custom_call.1} parent=1 // pred_fallthru
      _
    %v12 = vld [vmem:[%s0] sm:$0xff]
    %v13 = vld [vmem:[%s1] sm:$0xff]
    %v14 = vlaneseq
    %v15 = vand.u32 %v14, 127
    %16 = vset.pattern.permute.xlu0 0
    %17 = vperm.xlu0 %16, %v13
    %v18 = vpop.permute.xlu0 %17
    %vm19 = vcmp.eq.s32.totalorder %v15, %v18
    %vm20 = vcmask 261120
    %v21 = vsel %vm20, %v12, -inf
    %22 = vmax.xlane.f32.xlu0 %v21
    %v23 = vpop.xlane.xlu0 %22
    %v24 = vsub.f32 %v12, %v23
    %v25 = vmul.f32 %v24, 1.442695
    %v26 = vpow.pop %v25
    %v27 = vsel %vm20, %v26, 0.0
    %28 = vadd.xlane.f32.xlu0 %v27
    %v29 = vpop.xlane.xlu0 %28
    %v30 = vsel %vm19, %v12, 0.0
    %v31 = vsel %vm20, %v30, 0.0
    %32 = vadd.xlane.f32.xlu0 %v31
    %v33 = vpop.xlane.xlu0 %32
    %v34 = vsub.f32 %v33, %v23
    %v35 = vmul.f32 %v34, 1.442695
    %v36 = vpow.pop %v35
    %v37 = vmul.f32 %v29, 1e-05
    %v38 = vadd.f32 %v36, %v37
    %v39 = vlog2.pop %v38
    %v40 = vmul.f32 %v39, 0.6931472
    %v41 = vlog2.pop %v29
    %v42 = vmul.f32 %v41, 0.6931472
    %v43 = vsub.f32 %v40, %v42
    %s44 = smul.u32 0, 8
    %v45 = vlaneseq
    %v46 = vshrl.u32 %v45, 7
    %v47 = vstv %s44
    %v48 = vadd.s32 %v47, %v46
    %vm49 = vcmp.lt.s32.totalorder %v48, 8
    %v50 = vsub.f32 0.0, %v43
    %v51 = vsel %vm49, %v50, 0.0
    %v52 = vrot.slane %v51, 4
    %v53 = vadd.f32 %v51, %v52
    %v54 = vrot.slane %v53, 2
    %v55 = vadd.f32 %v53, %v54
    %v56 = vrot.slane %v55, 1
    %v57 = vadd.f32 %v55, %v56
    %58 = vst [vmem:[#allocation2] sm:$0xff] %v57
    // Predicated region
    $region10: #{tpu_custom_call.1} parent=1 // pred_check
      _
    $region11: #{tpu_custom_call.1} parent=1 // pred_check_branch
      %60 = sbr.rel (0) target = $region13
    $region12: #{tpu_custom_call.1} parent=1 // pred_region
      %s62 = ssub.s32 128, 128
      %63 = vsyncadd [#allocation3], %s62
      %s65 = sshll.u32 [#allocation2], 4
      %s66 = int_to_ptr.vmem [resolvable:$true] %s65
      %68 = dma.vmem_to_hbm [thread:$0]  %s66, 128, %s2, [#allocation3]
    $region13: #{tpu_custom_call.1} parent=1 // pred_fallthru
      _
    // Predicated region
    $region14: #{tpu_custom_call.1} parent=1 // pred_check
      _
    $region15: #{tpu_custom_call.1} parent=1 // pred_check_branch
      %70 = sbr.rel (0) target = $region17
    $region16: #{tpu_custom_call.1} parent=1 // pred_region
      %71 = dma.done [#allocation3], 128
    $region17: #{tpu_custom_call.1} parent=1 // pred_fallthru
      _
    %72 = vsyncpa [#allocation3], 1

</llo_original>
